<compile_context>
chip_gen: v7x
topology: tpu7x:2x2x1
jax: 0.10.0
libtpu: 0.0.40
codegen_flags: <defaults>
</compile_context>

<pallas_src>
import functools
import math

import jax
import jax.numpy as jnp
from jax import lax
from jax.experimental import pallas as pl
from jax.experimental.pallas import tpu as pltpu

_VMEM = pl.BlockSpec(memory_space=pltpu.MemorySpace.VMEM)
_MXU_DTYPE = jnp.bfloat16  # MXU operand dtype (accumulation stays f32)


# ------------------------- in-kernel helper math ---------------------------

def _mm(a, b):
    """MXU matmul: bf16 operands, f32 accumulation."""
    return jnp.dot(a.astype(_MXU_DTYPE), b.astype(_MXU_DTYPE),
                   preferred_element_type=jnp.float32)


def _layernorm(x, g, b, eps):
    mu = jnp.mean(x, axis=-1, keepdims=True)
    var = jnp.mean(jnp.square(x - mu), axis=-1, keepdims=True)
    return (x - mu) * lax.rsqrt(var + eps) * g + b


# ----------------------------- Pallas kernels ------------------------------

def _patch_embed_kernel(p_ref, w_ref, b_ref, pos_ref, o_ref):
    """Fused: im2col-patches @ W + bias + pos_embed (one batch element)."""
    acc = _mm(p_ref[0], w_ref[...])                         # (N, D) f32
    acc = acc + b_ref[...].astype(jnp.float32) + pos_ref[0].astype(jnp.float32)
    o_ref[0] = acc.astype(o_ref.dtype)


def pallas_patch_embed(patches, w2d, bias, pos):
    """(B, N, CK) @ (CK, D) + bias + pos[1, N, D] -> (B, N, D)."""
    B, N, CK = patches.shape
    D = w2d.shape[1]
    return pl.pallas_call(
        _patch_embed_kernel,
        out_shape=jax.ShapeDtypeStruct((B, N, D), patches.dtype),
        grid=(B,),
        in_specs=[
            pl.BlockSpec((1, N, CK), lambda b: (b, 0, 0)),
            pl.BlockSpec((CK, D), lambda b: (0, 0)),
            pl.BlockSpec((1, D), lambda b: (0, 0)),
            pl.BlockSpec((1, N, D), lambda b: (0, 0, 0)),   # pos pinned to block 0
        ],
        out_specs=pl.BlockSpec((1, N, D), lambda b: (b, 0, 0)),
        compiler_params=pltpu.CompilerParams(dimension_semantics=("parallel",)),
    )(patches, w2d, bias.reshape(1, D), pos)


def _block_kernel(x_ref,
                  wqkv_ref, bqkv_ref, wo_ref, bo_ref, ln1g_ref, ln1b_ref,
                  w1_ref, b1_ref, w2_ref, b2_ref, ln2g_ref, ln2b_ref,
                  o_ref, attn_ref, *, nhead, eps):
    """One post-norm transformer encoder layer, fully fused, per batch elem.
       x = LN1(x + MHA(x)); x = LN2(x + FFN(x))  (ReLU FFN, norm_first=False)."""
    x = x_ref[0].astype(jnp.float32)                        # (N, D)
    N, D = x.shape
    hd = D // nhead
    scale = 1.0 / math.sqrt(hd)

    # --- multi-head self-attention: all heads inside one kernel body ---
    qkv = _mm(x, wqkv_ref[...]) + bqkv_ref[...].astype(jnp.float32)   # (N, 3D)
    q = qkv[:, 0 * D:1 * D]
    k = qkv[:, 1 * D:2 * D]
    v = qkv[:, 2 * D:3 * D]

    for h in range(nhead):                                  # static unroll
        lo, hi = h * hd, (h + 1) * hd
        qh, kh, vh = q[:, lo:hi], k[:, lo:hi], v[:, lo:hi]
        # q @ k^T via dot_general contracting last dims (no explicit transpose)
        s = lax.dot_general(qh.astype(_MXU_DTYPE), kh.astype(_MXU_DTYPE),
                            (((1,), (1,)), ((), ())),
                            preferred_element_type=jnp.float32) * scale
        s = s - jnp.max(s, axis=-1, keepdims=True)
        p = jnp.exp(s)
        p = p * pl.reciprocal(jnp.sum(p, axis=-1, keepdims=True), approx=True)
        attn_ref[:, lo:hi] = _mm(p, vh)                     # (N, hd)

    attn = _mm(attn_ref[...], wo_ref[...]) + bo_ref[...].astype(jnp.float32)
    x = _layernorm(x + attn,
                   ln1g_ref[...].astype(jnp.float32),
                   ln1b_ref[...].astype(jnp.float32), eps)

    # --- feed-forward ---
    hmid = jnp.maximum(_mm(x, w1_ref[...]) + b1_ref[...].astype(jnp.float32), 0.0)
    ffn = _mm(hmid, w2_ref[...]) + b2_ref[...].astype(jnp.float32)
    x = _layernorm(x + ffn,
                   ln2g_ref[...].astype(jnp.float32),
                   ln2b_ref[...].astype(jnp.float32), eps)

    o_ref[0] = x.astype(o_ref.dtype)


def pallas_transformer_block(x, bp, nhead, eps=1e-5):
    B, N, D = x.shape
    F = bp["lin1_w"].shape[1]

    def full2d(shape):
        return pl.BlockSpec(shape, lambda b: (0, 0))

    return pl.pallas_call(
        functools.partial(_block_kernel, nhead=nhead, eps=eps),
        out_shape=jax.ShapeDtypeStruct((B, N, D), x.dtype),
        grid=(B,),
        in_specs=[
            pl.BlockSpec((1, N, D), lambda b: (b, 0, 0)),
            full2d((D, 3 * D)), full2d((1, 3 * D)),
            full2d((D, D)), full2d((1, D)),
            full2d((1, D)), full2d((1, D)),
            full2d((D, F)), full2d((1, F)),
            full2d((F, D)), full2d((1, D)),
            full2d((1, D)), full2d((1, D)),
        ],
        out_specs=pl.BlockSpec((1, N, D), lambda b: (b, 0, 0)),
        scratch_shapes=[pltpu.VMEM((N, D), jnp.float32)],
        compiler_params=pltpu.CompilerParams(dimension_semantics=("parallel",)),
    )(x,
      bp["in_proj_w"], bp["in_proj_b"].reshape(1, -1),
      bp["out_proj_w"], bp["out_proj_b"].reshape(1, -1),
      bp["ln1_g"].reshape(1, -1), bp["ln1_b"].reshape(1, -1),
      bp["lin1_w"], bp["lin1_b"].reshape(1, -1),
      bp["lin2_w"], bp["lin2_b"].reshape(1, -1),
      bp["ln2_g"].reshape(1, -1), bp["ln2_b"].reshape(1, -1))


def _norm_pool_kernel(x_ref, g_ref, b_ref, o_ref, *, eps):
    """Fused final LayerNorm + token mean-pool: (B, N, D) -> (B, D)."""
    x = x_ref[...].astype(jnp.float32)
    xn = _layernorm(x, g_ref[...].astype(jnp.float32),
                    b_ref[...].astype(jnp.float32), eps)
    o_ref[...] = jnp.mean(xn, axis=1).astype(o_ref.dtype)


def pallas_norm_mean_pool(x, gamma, beta, eps=1e-5):
    B, N, D = x.shape
    return pl.pallas_call(
        functools.partial(_norm_pool_kernel, eps=eps),
        out_shape=jax.ShapeDtypeStruct((B, D), x.dtype),
        in_specs=[_VMEM, _VMEM, _VMEM],
        out_specs=_VMEM,
    )(x, gamma.reshape(1, 1, D), beta.reshape(1, 1, D))


def _norm_kernel(x_ref, g_ref, b_ref, o_ref, *, eps):
    x = x_ref[...].astype(jnp.float32)
    o_ref[...] = _layernorm(x, g_ref[...].astype(jnp.float32),
                            b_ref[...].astype(jnp.float32), eps).astype(o_ref.dtype)


def pallas_norm(x, gamma, beta, eps=1e-5):
    B, N, D = x.shape
    return pl.pallas_call(
        functools.partial(_norm_kernel, eps=eps),
        out_shape=jax.ShapeDtypeStruct((B, N, D), x.dtype),
        in_specs=[_VMEM, _VMEM, _VMEM],
        out_specs=_VMEM,
    )(x, gamma.reshape(1, 1, D), beta.reshape(1, 1, D))


# ------------------------------- glue (JAX) --------------------------------

def im2col_3d(x, ksize, stride, padding):
    """x: (B, C, T, H, W) -> patches (B, N, C*kT*kH*kW), matching PyTorch
    Conv3d weight flattening order (Cin, kT, kH, kW)."""
    kT, kH, kW = ksize
    sT, sH, sW = stride
    pT, pH, pW = padding
    xp = jnp.pad(x, ((0, 0), (0, 0), (pT, pT), (pH, pH), (pW, pW)))
    B, C, Tp, Hp, Wp = xp.shape
    To = (Tp - kT) // sT + 1
    Ho = (Hp - kH) // sH + 1
    Wo = (Wp - kW) // sW + 1
    cols = []
    for dt in range(kT):
        for dh in range(kH):
            for dw in range(kW):
                cols.append(xp[:, :,
                               dt:dt + To * sT:sT,
                               dh:dh + Ho * sH:sH,
                               dw:dw + Wo * sW:sW])
    patches = jnp.stack(cols, axis=2)                    # (B, C, K, To, Ho, Wo)
    patches = patches.transpose(0, 3, 4, 5, 1, 2)        # (B, To, Ho, Wo, C, K)
    patches = patches.reshape(B, To * Ho * Wo, C * kT * kH * kW)
    return patches, (To, Ho, Wo)


def init_params(key, *, in_ch=3, embed_dim=32, depth=2, nhead=4,
                ffn_dim=64, max_tokens=64):
    ks = jax.random.split(key, 4 + depth)
    kT, kH, kW = 3, 7, 7
    p = {
        "patch_w": jax.random.normal(ks[0], (embed_dim, in_ch, kT, kH, kW),
                                     jnp.float32) * 0.02,
        "patch_b": jnp.zeros((embed_dim,), jnp.float32),
        "pos_embed": jax.random.normal(ks[1], (1, max_tokens, embed_dim),
                                       jnp.float32) * 0.02,
        "norm_g": jnp.ones((embed_dim,), jnp.float32),
        "norm_b": jnp.zeros((embed_dim,), jnp.float32),
        "nhead": nhead,
        "embed_dim": embed_dim,
    }
    blocks = []
    for i in range(depth):
        bk = jax.random.split(ks[4 + i], 4)
        blocks.append(dict(
            in_proj_w=jax.random.normal(bk[0], (embed_dim, 3 * embed_dim),
                                        jnp.float32) * 0.02,
            in_proj_b=jnp.zeros((3 * embed_dim,), jnp.float32),
            out_proj_w=jax.random.normal(bk[1], (embed_dim, embed_dim),
                                         jnp.float32) * 0.02,
            out_proj_b=jnp.zeros((embed_dim,), jnp.float32),
            ln1_g=jnp.ones((embed_dim,), jnp.float32),
            ln1_b=jnp.zeros((embed_dim,), jnp.float32),
            lin1_w=jax.random.normal(bk[2], (embed_dim, ffn_dim),
                                     jnp.float32) * 0.02,
            lin1_b=jnp.zeros((ffn_dim,), jnp.float32),
            lin2_w=jax.random.normal(bk[3], (ffn_dim, embed_dim),
                                     jnp.float32) * 0.02,
            lin2_b=jnp.zeros((embed_dim,), jnp.float32),
            ln2_g=jnp.ones((embed_dim,), jnp.float32),
            ln2_b=jnp.zeros((embed_dim,), jnp.float32),
        ))
    p["blocks"] = blocks
    return p


def forward_features(params, x, return_pooled):
    """x: (B, C, T, H, W) -> (B, D) if pooled else (B, N, D)."""
    D = params["embed_dim"]

    # TODO(synk): im2col is done in XLA; for real-size video it should be a
    # strided-DMA gather inside the patch-embed kernel to avoid the ~16x HBM
    # inflation of the materialized patch tensor.
    patches, (To, Ho, Wo) = im2col_3d(x, (3, 7, 7), (2, 4, 4), (1, 3, 3))
    N = To * Ho * Wo
    max_tokens = params["pos_embed"].shape[1]
    assert N <= max_tokens, (
        f"token count {N} exceeds pos_embed capacity {max_tokens}")

    w2d = params["patch_w"].reshape(D, -1).T              # (Cin*kT*kH*kW, D)
    pos = params["pos_embed"][:, :N, :]                   # pos_embed[:, :N, :D]
    tokens = pallas_patch_embed(patches, w2d, params["patch_b"], pos)

    for bp in params["blocks"]:
        tokens = pallas_transformer_block(tokens, bp, params["nhead"])

    if return_pooled:
        return pallas_norm_mean_pool(tokens, params["norm_g"], params["norm_b"])
    return pallas_norm(tokens, params["norm_g"], params["norm_b"])


def mvit_backbone_forward(params, x, return_pooled=True):
    """Mirrors VideoMMAction2MViTBackbone.forward:
       (B,C,H,W) or (B,C,T,H,W) -> (B, feature_dim) when return_pooled."""
    if x.ndim == 4:
        x = x[:, :, None, :, :]                           # x.unsqueeze(2)
    return forward_features(params, x, return_pooled)


if __name__ == "__main__":
    key = jax.random.PRNGKey(0)
    pkey, xkey, x4key = jax.random.split(key, 3)
    params = init_params(pkey, in_ch=3, embed_dim=32, depth=2, nhead=4,
                         ffn_dim=64, max_tokens=64)

    # 5-D video input (B, C, T, H, W)
    x = jax.random.normal(xkey, (2, 3, 4, 16, 16), jnp.float32)
    out = jax.block_until_ready(mvit_backbone_forward(params, x, return_pooled=True))
    assert out.shape == (2, 32), out.shape
    assert bool(jnp.all(jnp.isfinite(out)))

    # 4-D image input (B, C, H, W) path (time dim inserted)
    x4 = jax.random.normal(x4key, (2, 3, 16, 16), jnp.float32)
    out4 = jax.block_until_ready(mvit_backbone_forward(params, x4, return_pooled=True))
    assert out4.shape == (2, 32), out4.shape
    assert bool(jnp.all(jnp.isfinite(out4)))

    print("KERNEL_OK")
</pallas_src>

<mosaic_0001>
module attributes {stable_mosaic.version = 11 : i64} {
  func.func @_patch_embed_kernel(%arg0: i32, %arg1: memref<1x32x441xf32, #tpu.memory_space<vmem>>, %arg2: memref<441x32xf32, #tpu.memory_space<vmem>>, %arg3: memref<1x32xf32, #tpu.memory_space<vmem>>, %arg4: memref<1x32x32xf32, #tpu.memory_space<vmem>>, %arg5: memref<1x32x32xf32, #tpu.memory_space<vmem>>) attributes {dimension_semantics = [#tpu.dimension_semantics<parallel>], iteration_bounds = array<i64: 2>, scalar_prefetch = 0 : i64, scratch_operands = 0 : i64, tpu.core_type = #tpu.core_type<tc>, window_params = [{transform_indices = @transform_0, window_bounds = array<i64: 1, 32, 441>}, {pipeline_mode = #tpu.pipeline_mode<synchronous>, transform_indices = @transform_1, window_bounds = array<i64: 441, 32>}, {pipeline_mode = #tpu.pipeline_mode<synchronous>, transform_indices = @transform_2, window_bounds = array<i64: 1, 32>}, {pipeline_mode = #tpu.pipeline_mode<synchronous>, transform_indices = @transform_3, window_bounds = array<i64: 1, 32, 32>}, {transform_indices = @transform_4, window_bounds = array<i64: 1, 32, 32>}]} {
    %c0 = arith.constant 0 : index
    %c0_0 = arith.constant 0 : index
    %c0_1 = arith.constant 0 : index
    %0 = vector.load %arg1[%c0, %c0_0, %c0_1] : memref<1x32x441xf32, #tpu.memory_space<vmem>>, vector<1x32x441xf32>
    %1 = vector.shape_cast %0 : vector<1x32x441xf32> to vector<32x441xf32>
    %c0_2 = arith.constant 0 : index
    %c0_3 = arith.constant 0 : index
    %2 = vector.load %arg2[%c0_2, %c0_3] : memref<441x32xf32, #tpu.memory_space<vmem>>, vector<441x32xf32>
    %3 = arith.truncf %1 : vector<32x441xf32> to vector<32x441xbf16>
    %4 = arith.truncf %2 : vector<441x32xf32> to vector<441x32xbf16>
    %cst = arith.constant dense<0.000000e+00> : vector<32x32xf32>
    %5 = tpu.matmul %3, %4, %cst {dimension_numbers = #tpu.dot_dimension_numbers<[1], [0], [0], [1], [0, 0, 1, 1], [], []>} : vector<32x441xbf16>, vector<441x32xbf16>, vector<32x32xf32> -> vector<32x32xf32>
    %c0_4 = arith.constant 0 : index
    %c0_5 = arith.constant 0 : index
    %6 = vector.load %arg3[%c0_4, %c0_5] : memref<1x32xf32, #tpu.memory_space<vmem>>, vector<1x32xf32>
    %7 = vector.broadcast %6 : vector<1x32xf32> to vector<32x32xf32>
    %8 = arith.addf %5, %7 : vector<32x32xf32>
    %c0_6 = arith.constant 0 : index
    %c0_7 = arith.constant 0 : index
    %c0_8 = arith.constant 0 : index
    %9 = vector.load %arg4[%c0_6, %c0_7, %c0_8] : memref<1x32x32xf32, #tpu.memory_space<vmem>>, vector<1x32x32xf32>
    %10 = vector.shape_cast %9 : vector<1x32x32xf32> to vector<32x32xf32>
    %11 = arith.addf %8, %10 : vector<32x32xf32>
    %c0_9 = arith.constant 0 : index
    %c0_10 = arith.constant 0 : index
    %c0_11 = arith.constant 0 : index
    %12 = vector.load %arg5[%c0_9, %c0_10, %c0_11] : memref<1x32x32xf32, #tpu.memory_space<vmem>>, vector<1x32x32xf32>
    %13 = vector.shape_cast %12 : vector<1x32x32xf32> to vector<32x32xf32>
    %14 = vector.shape_cast %11 : vector<32x32xf32> to vector<1x32x32xf32>
    tpu.vector_store %arg5[%c0_9, %c0_10, %c0_11], %14 {strides = array<i32>} : memref<1x32x32xf32, #tpu.memory_space<vmem>>, vector<1x32x32xf32>,
    return
  }
  func.func @transform_0(%arg0: i32) -> (i32, i32, i32) {
    %c0_i32 = arith.constant 0 : i32
    %c0_i32_0 = arith.constant 0 : i32
    %c0_i32_1 = arith.constant 0 : i32
    return %arg0, %c0_i32, %c0_i32_0 : i32, i32, i32
  }
  func.func @transform_1(%arg0: i32) -> (i32, i32) {
    %c0_i32 = arith.constant 0 : i32
    %c0_i32_0 = arith.constant 0 : i32
    %c0_i32_1 = arith.constant 0 : i32
    return %c0_i32, %c0_i32_0 : i32, i32
  }
  func.func @transform_2(%arg0: i32) -> (i32, i32) {
    %c0_i32 = arith.constant 0 : i32
    %c0_i32_0 = arith.constant 0 : i32
    %c0_i32_1 = arith.constant 0 : i32
    return %c0_i32, %c0_i32_0 : i32, i32
  }
  func.func @transform_3(%arg0: i32) -> (i32, i32, i32) {
    %c0_i32 = arith.constant 0 : i32
    %c0_i32_0 = arith.constant 0 : i32
    %c0_i32_1 = arith.constant 0 : i32
    %c0_i32_2 = arith.constant 0 : i32
    return %c0_i32, %c0_i32_0, %c0_i32_1 : i32, i32, i32
  }
  func.func @transform_4(%arg0: i32) -> (i32, i32, i32) {
    %c0_i32 = arith.constant 0 : i32
    %c0_i32_0 = arith.constant 0 : i32
    %c0_i32_1 = arith.constant 0 : i32
    return %arg0, %c0_i32, %c0_i32_0 : i32, i32, i32
  }
}

</mosaic_0001>

<llo_original>
// kernel: tpu_custom_call.1
$region0: #{tpu_custom_call.1}
  #allocation0 [shape = 'u32[]', space=smem, size = 0x4, offset = 0x4, fixed_abs, tag = 'smem constant byte address 0x4 - core index']
  #allocation1 [shape = 'u32[144,128]{1,0:T(1,128)}', space=vmem, size = 0x12000, scoped, tag = 'internal scratch']
  %s0 = inlined_call_operand.vmem [shape: f32[2,32,441], index: 0, kind: input, shape index: {}]
  %s1 = inlined_call_operand.vmem [shape: f32[441,32], index: 1, kind: input, shape index: {}]
  %s2 = inlined_call_operand.vmem [shape: f32[1,32], index: 2, kind: input, shape index: {}]
  %s3 = inlined_call_operand.vmem [shape: f32[1,32,32], index: 3, kind: input, shape index: {}]
  %s4 = inlined_call_operand.hbm [shape: f32[2,32,32], index: 4, kind: output, shape index: {}]
  %s5 = sld [smem:[#allocation0]]
  $region49: #{tpu_custom_call.1} parent=0
    _
  %s7 = ssub.s32 1, %s5
  %s8 = scalar_select 0, %s7, %s5
  $region1: #{tpu_custom_call.1} parent=0
    #allocation2 [shape = 'u8[32768]{0}', space=vmem, size = 0x8000, scoped, tag = 'output window, operand 0']
    #allocation3 [shape = 's32[2]{0}', space=sflag, size = 0x8, scoped, tag = 'scoped memory for tpu_custom_call.1']
    %9 = vsyncpa [#allocation3], 0
    %s10 = scalar_lea.sflag [#allocation3], 1
    %11 = vsyncpa %s10, 0
    loop: start=0, step=1, limit=4
    $region2: #{tpu_custom_call.1} parent=1 // loop_pre_header
      _
    $region3: #{tpu_custom_call.1} parent=1 // loop_header
      %s13 = sphi 0, %s17
      %p14 = scmp.ge.s32.totalorder %s13, 4
      %s23 = sphi 0, %s25
      %s26 = sphi 0, %s23
      %s27 = sphi 0, %s26
      %s43 = sphi 0, %s27
      %s47 = sphi 0, %s47
      %s49 = sphi 0, %s47
      %s50 = sphi 0, %s49
      %s64 = sphi 0, %s50
      %s68 = sphi 0, %s68
      %s70 = sphi 0, %s68
      %s71 = sphi 0, %s70
      %s85 = sphi 0, %s71
      %s89 = sphi 0, %s89
      %s91 = sphi 0, %s89
      %s92 = sphi 0, %s91
      %s106 = sphi 0, %s92
      %s112 = sphi 0, %s114
      %s115 = sphi 0, %s112
      %s116 = sphi 0, %s115
      %s132 = sphi 0, %s116
    $region4: #{tpu_custom_call.1} parent=1 // loop_header_branch
      %16 = sbr.rel (%p14) target = $region8
    $region5: #{tpu_custom_call.1} parent=1 // loop_body
      %s18 = ssub.s32 %s13, 1
      %s19 = ssub.s32 %s13, 2
      %s20 = sadd.s32 %s13, 1
      %s21 = ssub.s32 %s13, %s20
      %p22 = scmp.eq.s32.totalorder %s21, 0
      %s24 = sadd.s32 %s23, 1
      %s25 = scalar_select %p22, %s23, %s24
      %p28 = pneg %p22
      %p29 = scmp.eq.s32.totalorder %s13, 1
      %p30 = por %p28, %p29
      %p31 = scmp.ne.s32.totalorder %s23, %s26
      %p32 = scmp.eq.s32.totalorder %s13, 0
      %p33 = por %p31, %p32
      %p34 = scmp.ne.s32.totalorder %s23, %s26
      %p35 = scmp.eq.s32.totalorder %s18, 1
      %p36 = por %p34, %p35
      %p37 = scmp.ne.s32.totalorder %s26, %s27
      %p38 = scmp.eq.s32.totalorder %s18, 0
      %p39 = por %p37, %p38
      %p40 = scmp.ne.s32.totalorder %s26, %s27
      %p41 = scmp.eq.s32.totalorder %s19, 1
      %p42 = por %p40, %p41
      %p44 = scmp.ne.s32.totalorder %s27, %s43
      %p45 = scmp.eq.s32.totalorder %s19, 0
      %p46 = por %p44, %p45
      %s48 = sadd.s32 %s47, 1
      %p51 = scmp.eq.s32.totalorder %s13, 1
      %p52 = scmp.ne.s32.totalorder %s47, %s49
      %p53 = scmp.eq.s32.totalorder %s13, 0
      %p54 = por %p52, %p53
      %p55 = scmp.ne.s32.totalorder %s47, %s49
      %p56 = scmp.eq.s32.totalorder %s18, 1
      %p57 = por %p55, %p56
      %p58 = scmp.ne.s32.totalorder %s49, %s50
      %p59 = scmp.eq.s32.totalorder %s18, 0
      %p60 = por %p58, %p59
      %p61 = scmp.ne.s32.totalorder %s49, %s50
      %p62 = scmp.eq.s32.totalorder %s19, 1
      %p63 = por %p61, %p62
      %p65 = scmp.ne.s32.totalorder %s50, %s64
      %p66 = scmp.eq.s32.totalorder %s19, 0
      %p67 = por %p65, %p66
      %s69 = sadd.s32 %s68, 1
      %p72 = scmp.eq.s32.totalorder %s13, 1
      %p73 = scmp.ne.s32.totalorder %s68, %s70
      %p74 = scmp.eq.s32.totalorder %s13, 0
      %p75 = por %p73, %p74
      %p76 = scmp.ne.s32.totalorder %s68, %s70
      %p77 = scmp.eq.s32.totalorder %s18, 1
      %p78 = por %p76, %p77
      %p79 = scmp.ne.s32.totalorder %s70, %s71
      %p80 = scmp.eq.s32.totalorder %s18, 0
      %p81 = por %p79, %p80
      %p82 = scmp.ne.s32.totalorder %s70, %s71
      %p83 = scmp.eq.s32.totalorder %s19, 1
      %p84 = por %p82, %p83
      %p86 = scmp.ne.s32.totalorder %s71, %s85
      %p87 = scmp.eq.s32.totalorder %s19, 0
      %p88 = por %p86, %p87
      %s90 = sadd.s32 %s89, 1
      %p93 = scmp.eq.s32.totalorder %s13, 1
      %p94 = scmp.ne.s32.totalorder %s89, %s91
      %p95 = scmp.eq.s32.totalorder %s13, 0
      %p96 = por %p94, %p95
      %p97 = scmp.ne.s32.totalorder %s89, %s91
      %p98 = scmp.eq.s32.totalorder %s18, 1
      %p99 = por %p97, %p98
      %p100 = scmp.ne.s32.totalorder %s91, %s92
      %p101 = scmp.eq.s32.totalorder %s18, 0
      %p102 = por %p100, %p101
      %p103 = scmp.ne.s32.totalorder %s91, %s92
      %p104 = scmp.eq.s32.totalorder %s19, 1
      %p105 = por %p103, %p104
      %p107 = scmp.ne.s32.totalorder %s92, %s106
      %p108 = scmp.eq.s32.totalorder %s19, 0
      %p109 = por %p107, %p108
      %s110 = ssub.s32 %s13, %s20
      %p111 = scmp.eq.s32.totalorder %s110, 0
      %s113 = sadd.s32 %s112, 1
      %s114 = scalar_select %p111, %s112, %s113
      %p117 = pneg %p111
      %p118 = scmp.eq.s32.totalorder %s13, 1
      %p119 = por %p117, %p118
      %p120 = scmp.ne.s32.totalorder %s112, %s115
      %p121 = scmp.eq.s32.totalorder %s13, 0
      %p122 = por %p120, %p121
      %p123 = scmp.ne.s32.totalorder %s112, %s115
      %p124 = scmp.eq.s32.totalorder %s18, 1
      %p125 = por %p123, %p124
      %p126 = scmp.ne.s32.totalorder %s115, %s116
      %p127 = scmp.eq.s32.totalorder %s18, 0
      %p128 = por %p126, %p127
      %p129 = scmp.ne.s32.totalorder %s115, %s116
      %p130 = scmp.eq.s32.totalorder %s19, 1
      %p131 = por %p129, %p130
      %p133 = scmp.ne.s32.totalorder %s116, %s132
      %p134 = scmp.eq.s32.totalorder %s19, 0
      %p135 = por %p133, %p134
      %p136 = scmp.le.s32.totalorder 1, %s13
      %p137 = scmp.lt.s32.totalorder %s13, 3
      %p138 = pnand %p136, %p137
      %p139 = pneg %p138
      // Predicated region
      $region9: #{tpu_custom_call.1} parent=5 // pred_check
        _
      $region10: #{tpu_custom_call.1} parent=5 // pred_check_branch
        %141 = sbr.rel (%p138) target = $region12
      $region11: #{tpu_custom_call.1} parent=5 // pred_region
        %s142 = ssub.s32 %s13, 1
        // Predicated region
        $region13: #{tpu_custom_call.1} parent=11 // pred_check
          %p143 = pneg %p60
        $region14: #{tpu_custom_call.1} parent=11 // pred_check_branch
          %145 = sbr.rel (%p143) target = $region16
        $region15: #{tpu_custom_call.1} parent=11 // pred_region
          _
        $region16: #{tpu_custom_call.1} parent=11 // pred_fallthru
          _
        // Predicated region
        $region17: #{tpu_custom_call.1} parent=11 // pred_check
          %p146 = pneg %p81
        $region18: #{tpu_custom_call.1} parent=11 // pred_check_branch
          %148 = sbr.rel (%p146) target = $region20
        $region19: #{tpu_custom_call.1} parent=11 // pred_region
          _
        $region20: #{tpu_custom_call.1} parent=11 // pred_fallthru
          _
        // Predicated region
        $region21: #{tpu_custom_call.1} parent=11 // pred_check
          %p149 = pneg %p102
        $region22: #{tpu_custom_call.1} parent=11 // pred_check_branch
          %151 = sbr.rel (%p149) target = $region24
        $region23: #{tpu_custom_call.1} parent=11 // pred_region
          _
        $region24: #{tpu_custom_call.1} parent=11 // pred_fallthru
          _
      $region12: #{tpu_custom_call.1} parent=5 // pred_fallthru
        _
      %p152 = scmp.lt.s32.totalorder %s13, 2
      // Predicated region
      $region25: #{tpu_custom_call.1} parent=5 // pred_check
        %p153 = pneg %p152
      $region26: #{tpu_custom_call.1} parent=5 // pred_check_branch
        %155 = sbr.rel (%p153) target = $region28
      $region27: #{tpu_custom_call.1} parent=5 // pred_region
        // Predicated region
        $region29: #{tpu_custom_call.1} parent=27 // pred_check
          %p156 = pneg %p33
        $region30: #{tpu_custom_call.1} parent=27 // pred_check_branch
          %158 = sbr.rel (%p156) target = $region32
        $region31: #{tpu_custom_call.1} parent=27 // pred_region
          %p159 = scmp.lt.s32.totalorder %s13, 1
          %s160 = scalar_select %p159, %s13, 1
          %s161 = smul.addr %s160, 16
          %s162 = smul.addr %s161, 8
          %s163 = scalar_lea.vmem %s0, %s162
        $region32: #{tpu_custom_call.1} parent=27 // pred_fallthru
          _
      $region28: #{tpu_custom_call.1} parent=5 // pred_fallthru
        _
      %p164 = scmp.le.s32.totalorder 1, %s13
      %p165 = scmp.lt.s32.totalorder %s13, 3
      %p166 = pnand %p164, %p165
      %p167 = pneg %p166
      // Predicated region
      $region33: #{tpu_custom_call.1} parent=5 // pred_check
        _
      $region34: #{tpu_custom_call.1} parent=5 // pred_check_branch
        %169 = sbr.rel (%p166) target = $region36
      $region35: #{tpu_custom_call.1} parent=5 // pred_region
        %s170 = ssub.s32 %s13, 1
        %p171 = scmp.lt.s32.totalorder %s18, 1
        %s172 = scalar_select %p171, %s18, 1
        %s173 = smul.addr %s172, 16
        %s174 = smul.addr %s173, 8
        %s175 = scalar_lea.vmem %s0, %s174
        %p176 = pneg %p39
        %p177 = pneg %p36
        %p178 = pneg %p60
        %p179 = pneg %p57
        %p180 = pneg %p81
        %p181 = pneg %p78
        %p182 = pneg %p102
        %p183 = pneg %p99
        %p184 = pneg %p128
        %p185 = pneg %p125
        %s186 = sand.u32 %s115, 1
        %s187 = scalar_lea.sflag [#allocation3], %s186
        %s188 = sand.u32 %s115, 1
        %s189 = smul.addr %s188, 32
        %s190 = scalar_lea.vmem [#allocation2], %s189
        %p191 = scmp.lt.s32.totalorder %s18, 1
        %s192 = scalar_select %p191, %s18, 1
        %s193 = smul.addr %s192, 16
        %s194 = smul.addr %s193, 8
        %s195 = scalar_lea.vmem %s0, %s194
        %v197 = vld [vmem:[%s195] sm:$0xff]
        %v198 = vld [vmem:[%s195 + $0x8] sm:$0xff]
        %v199 = vld [vmem:[%s195 + $0x10] sm:$0xff]
        %v200 = vld [vmem:[%s195 + $0x18] sm:$0xff]
        %v201 = vld [vmem:[%s195 + $0x20] sm:$0xff]
        %v202 = vld [vmem:[%s195 + $0x28] sm:$0xff]
        %v203 = vld [vmem:[%s195 + $0x30] sm:$0xff]
        %v204 = vld [vmem:[%s195 + $0x38] sm:$0xff]
        %v205 = vld [vmem:[%s195 + $0x40] sm:$0xff]
        %v206 = vld [vmem:[%s195 + $0x48] sm:$0xff]
        %v207 = vld [vmem:[%s195 + $0x50] sm:$0xff]
        %v208 = vld [vmem:[%s195 + $0x58] sm:$0xff]
        %v209 = vld [vmem:[%s195 + $0x60] sm:$0xff]
        %v210 = vld [vmem:[%s195 + $0x68] sm:$0xff]
        %v211 = vld [vmem:[%s195 + $0x70] sm:$0xff]
        %v212 = vld [vmem:[%s195 + $0x78] sm:$0xff]
        %v213 = vld [vmem:[%s1] sm:$0xff]
        %v214 = vld [vmem:[%s1 + $0x8] sm:$0xff]
        %v215 = vld [vmem:[%s1 + $0x10] sm:$0xff]
        %v216 = vld [vmem:[%s1 + $0x18] sm:$0xff]
        %v217 = vld [vmem:[%s1 + $0x20] sm:$0xff]
        %v218 = vld [vmem:[%s1 + $0x28] sm:$0xff]
        %v219 = vld [vmem:[%s1 + $0x30] sm:$0xff]
        %v220 = vld [vmem:[%s1 + $0x38] sm:$0xff]
        %v221 = vld [vmem:[%s1 + $0x40] sm:$0xff]
        %v222 = vld [vmem:[%s1 + $0x48] sm:$0xff]
        %v223 = vld [vmem:[%s1 + $0x50] sm:$0xff]
        %v224 = vld [vmem:[%s1 + $0x58] sm:$0xff]
        %v225 = vld [vmem:[%s1 + $0x60] sm:$0xff]
        %v226 = vld [vmem:[%s1 + $0x68] sm:$0xff]
        %v227 = vld [vmem:[%s1 + $0x70] sm:$0xff]
        %v228 = vld [vmem:[%s1 + $0x78] sm:$0xff]
        %v229 = vld [vmem:[%s1 + $0x80] sm:$0xff]
        %v230 = vld [vmem:[%s1 + $0x88] sm:$0xff]
        %v231 = vld [vmem:[%s1 + $0x90] sm:$0xff]
        %v232 = vld [vmem:[%s1 + $0x98] sm:$0xff]
        %v233 = vld [vmem:[%s1 + $0xa0] sm:$0xff]
        %v234 = vld [vmem:[%s1 + $0xa8] sm:$0xff]
        %v235 = vld [vmem:[%s1 + $0xb0] sm:$0xff]
        %v236 = vld [vmem:[%s1 + $0xb8] sm:$0xff]
        %v237 = vld [vmem:[%s1 + $0xc0] sm:$0xff]
        %v238 = vld [vmem:[%s1 + $0xc8] sm:$0xff]
        %v239 = vld [vmem:[%s1 + $0xd0] sm:$0xff]
        %v240 = vld [vmem:[%s1 + $0xd8] sm:$0xff]
        %v241 = vld [vmem:[%s1 + $0xe0] sm:$0xff]
        %v242 = vld [vmem:[%s1 + $0xe8] sm:$0xff]
        %v243 = vld [vmem:[%s1 + $0xf0] sm:$0xff]
        %v244 = vld [vmem:[%s1 + $0xf8] sm:$0xff]
        %v245 = vld [vmem:[%s1 + $0x100] sm:$0xff]
        %v246 = vld [vmem:[%s1 + $0x108] sm:$0xff]
        %v247 = vld [vmem:[%s1 + $0x110] sm:$0xff]
        %v248 = vld [vmem:[%s1 + $0x118] sm:$0xff]
        %v249 = vld [vmem:[%s1 + $0x120] sm:$0xff]
        %v250 = vld [vmem:[%s1 + $0x128] sm:$0xff]
        %v251 = vld [vmem:[%s1 + $0x130] sm:$0xff]
        %v252 = vld [vmem:[%s1 + $0x138] sm:$0xff]
        %v253 = vld [vmem:[%s1 + $0x140] sm:$0xff]
        %v254 = vld [vmem:[%s1 + $0x148] sm:$0xff]
        %v255 = vld [vmem:[%s1 + $0x150] sm:$0xff]
        %v256 = vld [vmem:[%s1 + $0x158] sm:$0xff]
        %v257 = vld [vmem:[%s1 + $0x160] sm:$0xff]
        %v258 = vld [vmem:[%s1 + $0x168] sm:$0xff]
        %v259 = vld [vmem:[%s1 + $0x170] sm:$0xff]
        %v260 = vld [vmem:[%s1 + $0x178] sm:$0xff]
        %v261 = vld [vmem:[%s1 + $0x180] sm:$0xff]
        %v262 = vld [vmem:[%s1 + $0x188] sm:$0xff]
        %v263 = vld [vmem:[%s1 + $0x190] sm:$0xff]
        %v264 = vld [vmem:[%s1 + $0x198] sm:$0xff]
        %v265 = vld [vmem:[%s1 + $0x1a0] sm:$0xff]
        %v266 = vld [vmem:[%s1 + $0x1a8] sm:$0xff]
        %v267 = vld [vmem:[%s1 + $0x1b0] sm:$0xff]
        %v268 = vld [vmem:[%s1 + $0x1b8] sm:$0x1]
        %v269 = vpack.c.bf16 %v201, %v197
        %v270 = vpack.c.bf16 %v202, %v198
        %v271 = vpack.c.bf16 %v203, %v199
        %v272 = vpack.c.bf16 %v204, %v200
        %v273 = vpack.c.bf16 %v209, %v205
        %v274 = vpack.c.bf16 %v210, %v206
        %v275 = vpack.c.bf16 %v211, %v207
        %v276 = vpack.c.bf16 %v212, %v208
        %v277 = vpack.c.bf16 %v214, %v213
        %v278 = vpack.c.bf16 %v216, %v215
        %v279 = vpack.c.bf16 %v218, %v217
        %v280 = vpack.c.bf16 %v220, %v219
        %v281 = vpack.c.bf16 %v222, %v221
        %v282 = vpack.c.bf16 %v224, %v223
        %v283 = vpack.c.bf16 %v226, %v225
        %v284 = vpack.c.bf16 %v228, %v227
        %v285 = vpack.c.bf16 %v230, %v229
        %v286 = vpack.c.bf16 %v232, %v231
        %v287 = vpack.c.bf16 %v234, %v233
        %v288 = vpack.c.bf16 %v236, %v235
        %v289 = vpack.c.bf16 %v238, %v237
        %v290 = vpack.c.bf16 %v240, %v239
        %v291 = vpack.c.bf16 %v242, %v241
        %v292 = vpack.c.bf16 %v244, %v243
        %v293 = vpack.c.bf16 %v246, %v245
        %v294 = vpack.c.bf16 %v248, %v247
        %v295 = vpack.c.bf16 %v250, %v249
        %v296 = vpack.c.bf16 %v252, %v251
        %v297 = vpack.c.bf16 %v254, %v253
        %v298 = vpack.c.bf16 %v256, %v255
        %v299 = vpack.c.bf16 %v258, %v257
        %v300 = vpack.c.bf16 %v260, %v259
        %v301 = vpack.c.bf16 %v262, %v261
        %v302 = vpack.c.bf16 %v264, %v263
        %v303 = vpack.c.bf16 %v266, %v265
        %v304 = vpack.c.bf16 %v268, %v267
        %v305 = vld [vmem:[%s2] sm:$0x1]
        %v307 = vlaneseq
        %v308 = vshrl.u32 %v307, 7
        %v309 = vsub.s32 0, %v308
        %v310 = vrot.slane %v305, %v309
        %vm312 = vcmask 465920
        %v314 = vsel %vm312, %v272, 0
        %v317 = vsel %vm312, %v276, 0
        %vm319 = vcmask 1043456
        %vm320 = vcmask 1044480
        %v321 = vsel %vm319, 4294967295, 65535
        %v322 = vsel %vm320, %v321, 0
        %v324 = vand.u32 %v304, %v322
        %326 = vmatprep.subr.bf16.mxu0 0
        %327 = vmatpush1.bf16.msra.mxu0 %v277
        %328 = vmatprep.subr.bf16.mxu0 0
        %329 = vmatpush1.bf16.msra.mxu0 %v278
        %330 = vmatprep.subr.bf16.mxu0 0
        %331 = vmatpush1.bf16.msra.mxu0 %v279
        %332 = vmatprep.subr.bf16.mxu0 0
        %333 = vmatpush1.bf16.msra.mxu0 %v280
        %334 = vmatprep.subr.bf16.mxu0 0
        %335 = vmatpush1.bf16.msra.mxu0 %v281
        %336 = vmatprep.subr.bf16.mxu0 0
        %337 = vmatpush1.bf16.msra.mxu0 %v282
        %338 = vmatprep.subr.bf16.mxu0 0
        %339 = vmatpush1.bf16.msra.mxu0 %v283
        %340 = vmatprep.subr.bf16.mxu0 0
        %341 = vmatpush1.bf16.msra.mxu0 %v284
        %342 = vmatprep.subr.bf16.mxu0 0
        %343 = vmatpush1.bf16.msra.mxu0 %v285
        %344 = vmatprep.subr.bf16.mxu0 0
        %345 = vmatpush1.bf16.msra.mxu0 %v286
        %346 = vmatprep.subr.bf16.mxu0 0
        %347 = vmatpush1.bf16.msra.mxu0 %v287
        %348 = vmatprep.subr.bf16.mxu0 0
        %349 = vmatpush1.bf16.msra.mxu0 %v288
        %350 = vmatprep.subr.bf16.mxu0 0
        %351 = vmatpush1.bf16.msra.mxu0 %v289
        %352 = vmatprep.subr.bf16.mxu0 0
        %353 = vmatpush1.bf16.msra.mxu0 %v290
        %354 = vmatprep.subr.bf16.mxu0 0
        %355 = vmatpush1.bf16.msra.mxu0 %v291
        %356 = vmatprep.subr.bf16.mxu0 0
        %357 = vmatpush1.bf16.msra.mxu0 %v292
        %358 = vmatprep.mubr.bf16.mxu0 %v270
        %359 = vmatmul.mubr.bf16.gmra.mrb[0].mxu0 %v269
        %v360 = vpop.f32.mrb[0].mxu0
        %v361 = vadd.f32 %v310, %v360
        %v362 = vpop.f32.mrb[0].mxu0
        %v363 = vpop.f32.mrb[0].mxu0
        %v364 = vadd.f32 %v310, %v363
        %v365 = vpop.f32.mrb[0].mxu0
        %366 = vmatprep.mubr.bf16.mxu0 %v274
        %367 = vmatmul.mubr.bf16.gmra.mrb[0].mxu0 %v273
        %v368 = vpop.f32.mrb[0].mxu0
        %v369 = vadd.f32 %v310, %v368
        %v370 = vpop.f32.mrb[0].mxu0
        %v371 = vpop.f32.mrb[0].mxu0
        %v372 = vadd.f32 %v310, %v371
        %v373 = vpop.f32.mrb[0].mxu0
        %374 = vdwg.mxu0
        %375 = vmatprep.subr.bf16.mxu0 0
        %376 = vmatpush1.bf16.msra.mxu0 %v293
        %377 = vmatprep.subr.bf16.mxu0 0
        %378 = vmatpush1.bf16.msra.mxu0 %v294
        %379 = vmatprep.subr.bf16.mxu0 0
        %380 = vmatpush1.bf16.msra.mxu0 %v295
        %381 = vmatprep.subr.bf16.mxu0 0
        %382 = vmatpush1.bf16.msra.mxu0 %v296
        %383 = vmatprep.subr.bf16.mxu0 0
        %384 = vmatpush1.bf16.msra.mxu0 %v297
        %385 = vmatprep.subr.bf16.mxu0 0
        %386 = vmatpush1.bf16.msra.mxu0 %v298
        %387 = vmatprep.subr.bf16.mxu0 0
        %388 = vmatpush1.bf16.msra.mxu0 %v299
        %389 = vmatprep.subr.bf16.mxu0 0
        %390 = vmatpush1.bf16.msra.mxu0 %v300
        %391 = vmatprep.subr.bf16.mxu0 0
        %392 = vmatpush1.bf16.msra.mxu0 %v301
        %393 = vmatprep.subr.bf16.mxu0 0
        %394 = vmatpush1.bf16.msra.mxu0 %v302
        %395 = vmatprep.subr.bf16.mxu0 0
        %396 = vmatpush1.bf16.msra.mxu0 %v303
        %397 = vmatprep.subr.bf16.mxu0 0
        %398 = vmatpush1.bf16.msra.mxu0 %v324
        %399 = vmatprep.subr.bf16.mxu0 0
        %400 = vmatpush1.bf16.msra.mxu0 0
        %401 = vmatprep.subr.bf16.mxu0 0
        %402 = vmatpush1.bf16.msra.mxu0 0
        %403 = vmatprep.subr.bf16.mxu0 0
        %404 = vmatpush1.bf16.msra.mxu0 0
        %405 = vmatprep.subr.bf16.mxu0 0
        %406 = vmatpush1.bf16.msra.mxu0 0
        %407 = vmatprep.mubr.bf16.mxu0 %v314
        %408 = vmatmul.mubr.bf16.gmra.mrb[0].mxu0 %v271
        %v409 = vpop.f32.mrb[0].mxu0
        %v410 = vadd.f32 %v361, %v409
        %v411 = vpop.f32.mrb[0].mxu0
        %v412 = vpop.f32.mrb[0].mxu0
        %v413 = vadd.f32 %v364, %v412
        %v414 = vpop.f32.mrb[0].mxu0
        %415 = vmatprep.mubr.bf16.mxu0 %v317
        %416 = vmatmul.mubr.bf16.gmra.mrb[0].mxu0 %v275
        %v417 = vpop.f32.mrb[0].mxu0
        %v418 = vadd.f32 %v369, %v417
        %v419 = vpop.f32.mrb[0].mxu0
        %v420 = vpop.f32.mrb[0].mxu0
        %v421 = vadd.f32 %v372, %v420
        %v422 = vpop.f32.mrb[0].mxu0
        %423 = vdwg.mxu0
        %v424 = vld [vmem:[%s3] sm:$0xff]
        %v425 = vld [vmem:[%s3 + $0x8] sm:$0xff]
        %v426 = vld [vmem:[%s3 + $0x10] sm:$0xff]
        %v427 = vld [vmem:[%s3 + $0x18] sm:$0xff]
        %v428 = vadd.f32 %v410, %v424
        %v429 = vadd.f32 %v413, %v425
        %v430 = vadd.f32 %v418, %v426
        %v431 = vadd.f32 %v421, %v427
        %vm432 = vcmask 261120
        %433 = vst.msk [vmem:[%s190] sm:$0xff] %vm432, %v428
        %434 = vst.msk [vmem:[%s190 + $0x8] sm:$0xff] %vm432, %v429
        %435 = vst.msk [vmem:[%s190 + $0x10] sm:$0xff] %vm432, %v430
        %436 = vst.msk [vmem:[%s190 + $0x18] sm:$0xff] %vm432, %v431
        %s437 = sand.u32 %s115, 1
        %s438 = scalar_lea.sflag [#allocation3], %s437
        %s439 = sand.u32 %s115, 1
        %s440 = smul.addr %s439, 32
        %s441 = scalar_lea.vmem [#allocation2], %s440
        // Predicated region
        $region37: #{tpu_custom_call.1} parent=35 // pred_check
          %p442 = pneg %p125
        $region38: #{tpu_custom_call.1} parent=35 // pred_check_branch
          %444 = sbr.rel (%p442) target = $region40
        $region39: #{tpu_custom_call.1} parent=35 // pred_region
          %s446 = ssub.s32 512, 512
          %447 = vsyncadd %s438, %s446
          %s448 = smul.addr %s18, 4
          %s449 = smul.addr %s448, 128
          %s450 = scalar_lea.hbm %s4, %s449
          %s451 = sshll.u32 %s441, 4
          %s452 = int_to_ptr.vmem [resolvable:$true] %s451
          %457 = dma.vmem_to_hbm [thread:$0]  %s452, 512, %s450, %s438, 128, 128, 8
        $region40: #{tpu_custom_call.1} parent=35 // pred_fallthru
          _
      $region36: #{tpu_custom_call.1} parent=5 // pred_fallthru
        _
      %p458 = scmp.le.s32.totalorder 2, %s13
      // Predicated region
      $region41: #{tpu_custom_call.1} parent=5 // pred_check
        %p459 = pneg %p458
      $region42: #{tpu_custom_call.1} parent=5 // pred_check_branch
        %461 = sbr.rel (%p459) target = $region44
      $region43: #{tpu_custom_call.1} parent=5 // pred_region
        %s462 = ssub.s32 %s13, 2
        // Predicated region
        $region45: #{tpu_custom_call.1} parent=43 // pred_check
          %p463 = pneg %p131
        $region46: #{tpu_custom_call.1} parent=43 // pred_check_branch
          %465 = sbr.rel (%p463) target = $region48
        $region47: #{tpu_custom_call.1} parent=43 // pred_region
          %s466 = sand.u32 %s116, 1
          %s467 = scalar_lea.sflag [#allocation3], %s466
          %s468 = sand.u32 %s116, 1
          %s469 = smul.addr %s468, 32
          %s470 = scalar_lea.vmem [#allocation2], %s469
          %471 = dma.done %s467, 512
        $region48: #{tpu_custom_call.1} parent=43 // pred_fallthru
          _
      $region44: #{tpu_custom_call.1} parent=5 // pred_fallthru
        _
    $region6: #{tpu_custom_call.1} parent=1 // loop_footer
      %s17 = sadd.s32 1, %s13
    $region7: #{tpu_custom_call.1} parent=1 // loop_footer_branch
      %12 = sbr.rel target = $region3
    $region8: #{tpu_custom_call.1} parent=1 // loop_exit
      _
    %472 = vsyncpa [#allocation3], 1
    %s473 = scalar_lea.sflag [#allocation3], 1
    %474 = vsyncpa %s473, 1

</llo_original>
